<compile_context>
chip_gen: v7x
topology: tpu7x:2x2x1
jax: 0.10.0
libtpu: 0.0.40
codegen_flags: <defaults>
</compile_context>

<pallas_src>
import jax
import jax.numpy as jnp
from jax.experimental import pallas as pl
from jax.experimental.pallas import tpu as pltpu


def _shared_conv_kernel(w_ref, x_ref, o_ref):
    """One batch-block of the fused forward.

    w_ref: SMEM (4,) float32 raw conv taps [w00, w01, w10, w11].
    x_ref: VMEM (TB, H, W) input block.
    o_ref: VMEM (TB, H-1, W-1) output block.
    """
    # ---- scalar unit: taps, tap-sum, and the folded 2x scale (free slots) ----
    w00 = w_ref[0]
    w01 = w_ref[1]
    w10 = w_ref[2]
    w11 = w_ref[3]
    wsum = w00 + w01 + w10 + w11      # = conv2d(ones, w) at every output position
    # a + b = 2*conv2d(x, w) + sum(w): double the taps on the scalar ALU
    # instead of multiplying the whole tile by 2 on the VPU.
    w00d = w00 + w00
    w01d = w01 + w01
    w10d = w10 + w10
    w11d = w11 + w11

    x = x_ref[...]                    # (TB, H, W); math stays in f32
    ho = x_ref.shape[1] - 1           # static valid-conv output height
    wo = x_ref.shape[2] - 1           # static valid-conv output width

    # Valid 2x2 convolution via four statically-shifted views, fully unrolled.
    conv2 = (w00d * x[:, 0:ho, 0:wo]
             + w01d * x[:, 0:ho, 1:wo + 1]
             + w10d * x[:, 1:ho + 1, 0:wo]
             + w11d * x[:, 1:ho + 1, 1:wo + 1])

    o_ref[...] = (conv2 + wsum).astype(o_ref.dtype)


def shared_custom_conv_forward(x, weight, *, block_batch=None):
    """Fused `conv2d(x, w) + conv2d(x + 1, w)`.

    x: (N, 1, H, W) NCHW; weight: (1, 1, 2, 2). Returns (N, 1, H-1, W-1).
    """
    n, c, h, w = x.shape
    assert c == 1 and weight.shape == (1, 1, 2, 2), (
        "SharedCustomConv uses a single-channel 2x2 kernel")

    if block_batch is None:
        # Cap the per-block input footprint around 512 KiB: one grid step for
        # small problems, many (parallel) steps when the batch is large.
        block_batch = max(1, min(n, (512 * 1024) // max(1, h * w * 4)))
    block_batch = min(block_batch, n)
    grid = (pl.cdiv(n, block_batch),)

    x3d = x.reshape(n, h, w)                         # fold N*C (C == 1) together
    w_flat = weight.reshape(4).astype(jnp.float32)   # taps stay f32 in SMEM

    out3d = pl.pallas_call(
        _shared_conv_kernel,
        out_shape=jax.ShapeDtypeStruct((n, h - 1, w - 1), x.dtype),
        grid=grid,
        in_specs=[
            pl.BlockSpec(memory_space=pltpu.MemorySpace.SMEM),        # conv taps
            pl.BlockSpec((block_batch, h, w), lambda b: (b, 0, 0)),   # x block
        ],
        out_specs=pl.BlockSpec((block_batch, h - 1, w - 1), lambda b: (b, 0, 0)),
        compiler_params=pltpu.CompilerParams(
            dimension_semantics=("parallel",)),   # v7x: shard batch across both TCs
    )(w_flat, x3d)

    return out3d.reshape(n, 1, h - 1, w - 1)


def _reference_forward(x, weight):
    """Pure-JAX reference matching the PyTorch forward literally."""
    def conv2d_valid(inp):
        n, c, h, w = inp.shape
        out = jnp.zeros((n, c, h - 1, w - 1), inp.dtype)
        for di in range(2):
            for dj in range(2):
                out = out + weight[0, 0, di, dj] * inp[:, :, di:di + h - 1, dj:dj + w - 1]
        return out

    a = conv2d_valid(x)
    b = conv2d_valid(x + 1.0)
    return a + b


if __name__ == "__main__":
    key = jax.random.PRNGKey(0)
    # Module INPUT_SIZE is [1, 1, 4, 4]; the weight forces C == 1, so the
    # batched demo uses (16, 1, 8, 8) to exercise the batch grid.
    x = jax.random.normal(key, (16, 1, 8, 8), dtype=jnp.float32)
    weight = jnp.ones((1, 1, 2, 2), dtype=jnp.float32)   # module init: torch.ones

    out = shared_custom_conv_forward(x, weight, block_batch=4)   # grid = (4,)
    out = jax.block_until_ready(out)
    ref = _reference_forward(x, weight)
    assert out.shape == (16, 1, 7, 7), out.shape
    assert jnp.allclose(out, ref, atol=1e-5)

    # Also validate the module's canonical single-sample shape (1, 1, 4, 4).
    x1 = jax.random.normal(jax.random.PRNGKey(0), (1, 1, 4, 4), dtype=jnp.float32)
    out1 = jax.block_until_ready(shared_custom_conv_forward(x1, weight))
    assert out1.shape == (1, 1, 3, 3), out1.shape
    assert jnp.allclose(out1, _reference_forward(x1, weight), atol=1e-5)

    print("KERNEL_OK")
</pallas_src>

<mosaic_0001>
module attributes {stable_mosaic.version = 11 : i64} {
  func.func @_shared_conv_kernel(%arg0: i32, %arg1: memref<4xf32, #tpu.memory_space<smem>>, %arg2: memref<4x8x8xf32, #tpu.memory_space<vmem>>, %arg3: memref<4x7x7xf32, #tpu.memory_space<vmem>>) attributes {dimension_semantics = [#tpu.dimension_semantics<parallel>], iteration_bounds = array<i64: 4>, scalar_prefetch = 0 : i64, scratch_operands = 0 : i64, tpu.core_type = #tpu.core_type<tc>, window_params = [{transform_indices = @transform_0, window_bounds = array<i64: 4>}, {transform_indices = @transform_1, window_bounds = array<i64: 4, 8, 8>}, {transform_indices = @transform_2, window_bounds = array<i64: 4, 7, 7>}]} {
    %c0 = arith.constant 0 : index
    %0 = memref.load %arg1[%c0] : memref<4xf32, #tpu.memory_space<smem>>
    %c1 = arith.constant 1 : index
    %1 = memref.load %arg1[%c1] : memref<4xf32, #tpu.memory_space<smem>>
    %c2 = arith.constant 2 : index
    %2 = memref.load %arg1[%c2] : memref<4xf32, #tpu.memory_space<smem>>
    %c3 = arith.constant 3 : index
    %3 = memref.load %arg1[%c3] : memref<4xf32, #tpu.memory_space<smem>>
    %4 = arith.addf %0, %1 : f32
    %5 = arith.addf %4, %2 : f32
    %6 = arith.addf %5, %3 : f32
    %7 = arith.addf %0, %0 : f32
    %8 = arith.addf %1, %1 : f32
    %9 = arith.addf %2, %2 : f32
    %10 = arith.addf %3, %3 : f32
    %c0_0 = arith.constant 0 : index
    %c0_1 = arith.constant 0 : index
    %c0_2 = arith.constant 0 : index
    %11 = vector.load %arg2[%c0_0, %c0_1, %c0_2] : memref<4x8x8xf32, #tpu.memory_space<vmem>>, vector<4x8x8xf32>
    %12 = vector.extract_strided_slice %11 {offsets = [0, 0, 0], sizes = [4, 7, 7], strides = [1, 1, 1]} : vector<4x8x8xf32> to vector<4x7x7xf32>
    %13 = vector.broadcast %7 : f32 to vector<4x7x7xf32>
    %14 = arith.mulf %13, %12 : vector<4x7x7xf32>
    %15 = vector.extract_strided_slice %11 {offsets = [0, 0, 1], sizes = [4, 7, 7], strides = [1, 1, 1]} : vector<4x8x8xf32> to vector<4x7x7xf32>
    %16 = vector.broadcast %8 : f32 to vector<4x7x7xf32>
    %17 = arith.mulf %16, %15 : vector<4x7x7xf32>
    %18 = arith.addf %14, %17 : vector<4x7x7xf32>
    %19 = vector.extract_strided_slice %11 {offsets = [0, 1, 0], sizes = [4, 7, 7], strides = [1, 1, 1]} : vector<4x8x8xf32> to vector<4x7x7xf32>
    %20 = vector.broadcast %9 : f32 to vector<4x7x7xf32>
    %21 = arith.mulf %20, %19 : vector<4x7x7xf32>
    %22 = arith.addf %18, %21 : vector<4x7x7xf32>
    %23 = vector.extract_strided_slice %11 {offsets = [0, 1, 1], sizes = [4, 7, 7], strides = [1, 1, 1]} : vector<4x8x8xf32> to vector<4x7x7xf32>
    %24 = vector.broadcast %10 : f32 to vector<4x7x7xf32>
    %25 = arith.mulf %24, %23 : vector<4x7x7xf32>
    %26 = arith.addf %22, %25 : vector<4x7x7xf32>
    %27 = vector.broadcast %6 : f32 to vector<4x7x7xf32>
    %28 = arith.addf %26, %27 : vector<4x7x7xf32>
    %c0_3 = arith.constant 0 : index
    %c0_4 = arith.constant 0 : index
    %c0_5 = arith.constant 0 : index
    %29 = vector.load %arg3[%c0_3, %c0_4, %c0_5] : memref<4x7x7xf32, #tpu.memory_space<vmem>>, vector<4x7x7xf32>
    tpu.vector_store %arg3[%c0_3, %c0_4, %c0_5], %28 {strides = array<i32>} : memref<4x7x7xf32, #tpu.memory_space<vmem>>, vector<4x7x7xf32>,
    return
  }
  func.func @transform_0(%arg0: i32) -> i32 {
    %c0_i32 = arith.constant 0 : i32
    %c0_i32_0 = arith.constant 0 : i32
    return %c0_i32 : i32
  }
  func.func @transform_1(%arg0: i32) -> (i32, i32, i32) {
    %c0_i32 = arith.constant 0 : i32
    %c0_i32_0 = arith.constant 0 : i32
    %c0_i32_1 = arith.constant 0 : i32
    return %arg0, %c0_i32, %c0_i32_0 : i32, i32, i32
  }
  func.func @transform_2(%arg0: i32) -> (i32, i32, i32) {
    %c0_i32 = arith.constant 0 : i32
    %c0_i32_0 = arith.constant 0 : i32
    %c0_i32_1 = arith.constant 0 : i32
    return %arg0, %c0_i32, %c0_i32_0 : i32, i32, i32
  }
}

</mosaic_0001>

<llo_original>
// kernel: tpu_custom_call.1
$region0: #{tpu_custom_call.1}
  #allocation0 [shape = 'u32[]', space=smem, size = 0x4, offset = 0x4, fixed_abs, tag = 'smem constant byte address 0x4 - core index']
  #allocation1 [shape = 'u32[144,128]{1,0:T(1,128)}', space=vmem, size = 0x12000, scoped, tag = 'internal scratch']
  %s0 = inlined_call_operand.vmem [shape: f32[4], index: 0, kind: input, shape index: {}]
  %s1 = inlined_call_operand.vmem [shape: f32[16,8,8], index: 1, kind: input, shape index: {}]
  %s2 = inlined_call_operand.vmem [shape: f32[16,7,7], index: 2, kind: output, shape index: {}]
  %s3 = sld [smem:[#allocation0]]
  $region45: #{tpu_custom_call.1} parent=0
    _
  %s5 = ssub.s32 1, %s3
  %s6 = scalar_select 0, %s5, %s3
  $region1: #{tpu_custom_call.1} parent=0
    #allocation2 [shape = 'u8[512]{0}', space=smem, size = 0x200, scoped, tag = 'input window, operand 0, single buffered']
    #allocation3 [shape = 's32[2]{0}', space=sflag, size = 0x8, scoped, tag = 'scoped memory for tpu_custom_call.1']
    %7 = vsyncpa [#allocation3], 0
    loop: start=0, step=1, limit=6
    $region2: #{tpu_custom_call.1} parent=1 // loop_pre_header
      _
    $region3: #{tpu_custom_call.1} parent=1 // loop_header
      %s9 = sphi 0, %s13
      %p10 = scmp.ge.s32.totalorder %s9, 6
      %s17 = sphi 0, %s17
      %s19 = sphi 0, %s17
      %s20 = sphi 0, %s19
      %s34 = sphi 0, %s20
      %s40 = sphi 0, %s42
      %s43 = sphi 0, %s40
      %s44 = sphi 0, %s43
      %s60 = sphi 0, %s44
      %s66 = sphi 0, %s68
      %s69 = sphi 0, %s66
      %s70 = sphi 0, %s69
      %s86 = sphi 0, %s70
    $region4: #{tpu_custom_call.1} parent=1 // loop_header_branch
      %12 = sbr.rel (%p10) target = $region8
    $region5: #{tpu_custom_call.1} parent=1 // loop_body
      %s14 = ssub.s32 %s9, 1
      %s15 = ssub.s32 %s9, 2
      %s16 = sadd.s32 %s9, 1
      %s18 = sadd.s32 %s17, 1
      %p21 = scmp.eq.s32.totalorder %s9, 3
      %p22 = scmp.ne.s32.totalorder %s17, %s19
      %p23 = scmp.eq.s32.totalorder %s9, 0
      %p24 = por %p22, %p23
      %p25 = scmp.ne.s32.totalorder %s17, %s19
      %p26 = scmp.eq.s32.totalorder %s14, 3
      %p27 = por %p25, %p26
      %p28 = scmp.ne.s32.totalorder %s19, %s20
      %p29 = scmp.eq.s32.totalorder %s14, 0
      %p30 = por %p28, %p29
      %p31 = scmp.ne.s32.totalorder %s19, %s20
      %p32 = scmp.eq.s32.totalorder %s15, 3
      %p33 = por %p31, %p32
      %p35 = scmp.ne.s32.totalorder %s20, %s34
      %p36 = scmp.eq.s32.totalorder %s15, 0
      %p37 = por %p35, %p36
      %s38 = ssub.s32 %s9, %s16
      %p39 = scmp.eq.s32.totalorder %s38, 0
      %s41 = sadd.s32 %s40, 1
      %s42 = scalar_select %p39, %s40, %s41
      %p45 = pneg %p39
      %p46 = scmp.eq.s32.totalorder %s9, 3
      %p47 = por %p45, %p46
      %p48 = scmp.ne.s32.totalorder %s40, %s43
      %p49 = scmp.eq.s32.totalorder %s9, 0
      %p50 = por %p48, %p49
      %p51 = scmp.ne.s32.totalorder %s40, %s43
      %p52 = scmp.eq.s32.totalorder %s14, 3
      %p53 = por %p51, %p52
      %p54 = scmp.ne.s32.totalorder %s43, %s44
      %p55 = scmp.eq.s32.totalorder %s14, 0
      %p56 = por %p54, %p55
      %p57 = scmp.ne.s32.totalorder %s43, %s44
      %p58 = scmp.eq.s32.totalorder %s15, 3
      %p59 = por %p57, %p58
      %p61 = scmp.ne.s32.totalorder %s44, %s60
      %p62 = scmp.eq.s32.totalorder %s15, 0
      %p63 = por %p61, %p62
      %s64 = ssub.s32 %s9, %s16
      %p65 = scmp.eq.s32.totalorder %s64, 0
      %s67 = sadd.s32 %s66, 1
      %s68 = scalar_select %p65, %s66, %s67
      %p71 = pneg %p65
      %p72 = scmp.eq.s32.totalorder %s9, 3
      %p73 = por %p71, %p72
      %p74 = scmp.ne.s32.totalorder %s66, %s69
      %p75 = scmp.eq.s32.totalorder %s9, 0
      %p76 = por %p74, %p75
      %p77 = scmp.ne.s32.totalorder %s66, %s69
      %p78 = scmp.eq.s32.totalorder %s14, 3
      %p79 = por %p77, %p78
      %p80 = scmp.ne.s32.totalorder %s69, %s70
      %p81 = scmp.eq.s32.totalorder %s14, 0
      %p82 = por %p80, %p81
      %p83 = scmp.ne.s32.totalorder %s69, %s70
      %p84 = scmp.eq.s32.totalorder %s15, 3
      %p85 = por %p83, %p84
      %p87 = scmp.ne.s32.totalorder %s70, %s86
      %p88 = scmp.eq.s32.totalorder %s15, 0
      %p89 = por %p87, %p88
      %p90 = scmp.le.s32.totalorder 1, %s9
      %p91 = scmp.lt.s32.totalorder %s9, 5
      %p92 = pnand %p90, %p91
      %p93 = pneg %p92
      // Predicated region
      $region9: #{tpu_custom_call.1} parent=5 // pred_check
        _
      $region10: #{tpu_custom_call.1} parent=5 // pred_check_branch
        %95 = sbr.rel (%p92) target = $region12
      $region11: #{tpu_custom_call.1} parent=5 // pred_region
        %s96 = ssub.s32 %s9, 1
        // Predicated region
        $region13: #{tpu_custom_call.1} parent=11 // pred_check
          %p97 = pneg %p30
        $region14: #{tpu_custom_call.1} parent=11 // pred_check_branch
          %99 = sbr.rel (%p97) target = $region16
        $region15: #{tpu_custom_call.1} parent=11 // pred_region
          %s101 = ssub.s32 16, 16
          %102 = vsyncadd [#allocation3], %s101
          %s104 = sshll.u32 %s0, 4
          %s105 = int_to_ptr.vmem [resolvable:$true] %s104
          %107 = dma.vmem_to_smem %s105, 16, [#allocation2], [#allocation3]
        $region16: #{tpu_custom_call.1} parent=11 // pred_fallthru
          _
      $region12: #{tpu_custom_call.1} parent=5 // pred_fallthru
        _
      %p108 = scmp.lt.s32.totalorder %s9, 4
      // Predicated region
      $region17: #{tpu_custom_call.1} parent=5 // pred_check
        %p109 = pneg %p108
      $region18: #{tpu_custom_call.1} parent=5 // pred_check_branch
        %111 = sbr.rel (%p109) target = $region20
      $region19: #{tpu_custom_call.1} parent=5 // pred_region
        // Predicated region
        $region21: #{tpu_custom_call.1} parent=19 // pred_check
          %p112 = pneg %p50
        $region22: #{tpu_custom_call.1} parent=19 // pred_check_branch
          %114 = sbr.rel (%p112) target = $region24
        $region23: #{tpu_custom_call.1} parent=19 // pred_region
          %s115 = smul.u32 4, %s9
          %p116 = scmp.lt.s32.totalorder %s115, 15
          %s117 = scalar_select %p116, %s115, 15
          %s118 = smul.addr %s117, 8
          %s119 = scalar_lea.vmem %s1, %s118
          %s120 = smul.u32 4, %s9
        $region24: #{tpu_custom_call.1} parent=19 // pred_fallthru
          _
      $region20: #{tpu_custom_call.1} parent=5 // pred_fallthru
        _
      %p121 = scmp.le.s32.totalorder 1, %s9
      %p122 = scmp.lt.s32.totalorder %s9, 5
      %p123 = pnand %p121, %p122
      %p124 = pneg %p123
      // Predicated region
      $region25: #{tpu_custom_call.1} parent=5 // pred_check
        _
      $region26: #{tpu_custom_call.1} parent=5 // pred_check_branch
        %126 = sbr.rel (%p123) target = $region28
      $region27: #{tpu_custom_call.1} parent=5 // pred_region
        %s127 = ssub.s32 %s9, 1
        // Predicated region
        $region29: #{tpu_custom_call.1} parent=27 // pred_check
          %p128 = pneg %p30
        $region30: #{tpu_custom_call.1} parent=27 // pred_check_branch
          %130 = sbr.rel (%p128) target = $region32
        $region31: #{tpu_custom_call.1} parent=27 // pred_region
          %131 = dma.done [#allocation3], 16
        $region32: #{tpu_custom_call.1} parent=27 // pred_fallthru
          _
        %132 = sfence
        %p133 = pneg %p30
        %p134 = pneg %p27
        %s135 = smul.u32 4, %s14
        %p136 = scmp.lt.s32.totalorder %s135, 15
        %s137 = scalar_select %p136, %s135, 15
        %s138 = smul.addr %s137, 8
        %s139 = scalar_lea.vmem %s1, %s138
        %p140 = pneg %p56
        %p141 = pneg %p53
        %p142 = pneg %p82
        %p143 = pneg %p79
        %s144 = smul.u32 4, %s14
        %p145 = scmp.lt.s32.totalorder %s144, 15
        %s146 = scalar_select %p145, %s144, 15
        %s147 = smul.addr %s146, 8
        %s148 = scalar_lea.vmem %s2, %s147
        %s149 = smul.u32 4, %s14
        %p150 = scmp.lt.s32.totalorder %s149, 15
        %s151 = scalar_select %p150, %s149, 15
        %s152 = smul.addr %s151, 8
        %s153 = scalar_lea.vmem %s1, %s152
        %s154 = smul.u32 4, %s14
        %s155 = smul.u32 4, %s14
        %p156 = scmp.lt.s32.totalorder %s155, 15
        %s157 = scalar_select %p156, %s155, 15
        %s158 = smul.addr %s157, 8
        %s159 = scalar_lea.vmem %s2, %s158
        %s160 = smul.u32 4, %s14
        %s161 = sld [smem:[#allocation2]]
        %s162 = sld [smem:[#allocation2 + $0x1]]
        %s163 = sld [smem:[#allocation2 + $0x2]]
        %s164 = sld [smem:[#allocation2 + $0x3]]
        %s165 = sadd.f32 %s161, %s162
        %s166 = sadd.f32 %s165, %s163
        %s167 = sadd.f32 %s166, %s164
        %s168 = sadd.f32 %s161, %s161
        %s169 = sadd.f32 %s162, %s162
        %s170 = sadd.f32 %s163, %s163
        %s171 = sadd.f32 %s164, %s164
        %v172 = vld [vmem:[%s153] sm:$0xff]
        %v173 = vld [vmem:[%s153 + $0x8] sm:$0xff]
        %v174 = vld [vmem:[%s153 + $0x10] sm:$0xff]
        %v175 = vld [vmem:[%s153 + $0x18] sm:$0xff]
        %v176 = vstv %s168
        %v177 = vmul.f32 %v176, %v172
        %v178 = vmul.f32 %v176, %v173
        %v179 = vmul.f32 %v176, %v174
        %v180 = vmul.f32 %v176, %v175
        %v181 = vstv %s169
        %v182 = vmul.f32 %v181, %v172
        %v183 = vmul.f32 %v181, %v173
        %v184 = vmul.f32 %v181, %v174
        %v185 = vmul.f32 %v181, %v175
        %190 = vrot.lane.b32.xlu0 %v182, 127
        %v191 = vpop.permute.xlu0 %190
        %192 = vrot.lane.b32.xlu0 %v183, 127
        %v193 = vpop.permute.xlu0 %192
        %194 = vrot.lane.b32.xlu0 %v184, 127
        %v195 = vpop.permute.xlu0 %194
        %196 = vrot.lane.b32.xlu0 %v185, 127
        %v197 = vpop.permute.xlu0 %196
        %v202 = vadd.f32 %v177, %v191
        %v203 = vadd.f32 %v178, %v193
        %v204 = vadd.f32 %v179, %v195
        %v205 = vadd.f32 %v180, %v197
        %v206 = vstv %s170
        %v207 = vmul.f32 %v206, %v172
        %v208 = vmul.f32 %v206, %v173
        %v209 = vmul.f32 %v206, %v174
        %v210 = vmul.f32 %v206, %v175
        %v215 = vrot.slane %v207, 1
        %v216 = vrot.slane %v208, 1
        %v217 = vrot.slane %v209, 1
        %v218 = vrot.slane %v210, 1
        %v223 = vadd.f32 %v202, %v215
        %v224 = vadd.f32 %v203, %v216
        %v225 = vadd.f32 %v204, %v217
        %v226 = vadd.f32 %v205, %v218
        %v227 = vstv %s171
        %v228 = vmul.f32 %v227, %v172
        %v229 = vmul.f32 %v227, %v173
        %v230 = vmul.f32 %v227, %v174
        %v231 = vmul.f32 %v227, %v175
        %v236 = vrot.slane %v228, 1
        %v237 = vrot.slane %v229, 1
        %v238 = vrot.slane %v230, 1
        %v239 = vrot.slane %v231, 1
        %240 = vrot.lane.b32.xlu0 %v236, 127
        %v241 = vpop.permute.xlu0 %240
        %242 = vrot.lane.b32.xlu0 %v237, 127
        %v243 = vpop.permute.xlu0 %242
        %244 = vrot.lane.b32.xlu0 %v238, 127
        %v245 = vpop.permute.xlu0 %244
        %246 = vrot.lane.b32.xlu0 %v239, 127
        %v247 = vpop.permute.xlu0 %246
        %v252 = vadd.f32 %v223, %v241
        %v253 = vadd.f32 %v224, %v243
        %v254 = vadd.f32 %v225, %v245
        %v255 = vadd.f32 %v226, %v247
        %v256 = vstv %s167
        %v257 = vadd.f32 %v252, %v256
        %v258 = vadd.f32 %v253, %v256
        %v259 = vadd.f32 %v254, %v256
        %v260 = vadd.f32 %v255, %v256
        %vm261 = vcmask 55296
        %262 = vst.msk [vmem:[%s159] sm:$0x7f] %vm261, %v257
        %263 = vst.msk [vmem:[%s159 + $0x8] sm:$0x7f] %vm261, %v258
        %264 = vst.msk [vmem:[%s159 + $0x10] sm:$0x7f] %vm261, %v259
        %265 = vst.msk [vmem:[%s159 + $0x18] sm:$0x7f] %vm261, %v260
        %s266 = smul.u32 4, %s14
        %p267 = scmp.lt.s32.totalorder %s266, 15
        %s268 = scalar_select %p267, %s266, 15
        %s269 = smul.addr %s268, 8
        %s270 = scalar_lea.vmem %s2, %s269
        // Predicated region
        $region33: #{tpu_custom_call.1} parent=27 // pred_check
          %p271 = pneg %p79
        $region34: #{tpu_custom_call.1} parent=27 // pred_check_branch
          %273 = sbr.rel (%p271) target = $region36
        $region35: #{tpu_custom_call.1} parent=27 // pred_region
          %s274 = smul.u32 4, %s14
        $region36: #{tpu_custom_call.1} parent=27 // pred_fallthru
          _
      $region28: #{tpu_custom_call.1} parent=5 // pred_fallthru
        _
      %p275 = scmp.le.s32.totalorder 2, %s9
      // Predicated region
      $region37: #{tpu_custom_call.1} parent=5 // pred_check
        %p276 = pneg %p275
      $region38: #{tpu_custom_call.1} parent=5 // pred_check_branch
        %278 = sbr.rel (%p276) target = $region40
      $region39: #{tpu_custom_call.1} parent=5 // pred_region
        %s279 = ssub.s32 %s9, 2
        // Predicated region
        $region41: #{tpu_custom_call.1} parent=39 // pred_check
          %p280 = pneg %p85
        $region42: #{tpu_custom_call.1} parent=39 // pred_check_branch
          %282 = sbr.rel (%p280) target = $region44
        $region43: #{tpu_custom_call.1} parent=39 // pred_region
          %s283 = smul.u32 4, %s15
          %p284 = scmp.lt.s32.totalorder %s283, 15
          %s285 = scalar_select %p284, %s283, 15
          %s286 = smul.addr %s285, 8
          %s287 = scalar_lea.vmem %s2, %s286
        $region44: #{tpu_custom_call.1} parent=39 // pred_fallthru
          _
      $region40: #{tpu_custom_call.1} parent=5 // pred_fallthru
        _
    $region6: #{tpu_custom_call.1} parent=1 // loop_footer
      %s13 = sadd.s32 1, %s9
    $region7: #{tpu_custom_call.1} parent=1 // loop_footer_branch
      %8 = sbr.rel target = $region3
    $region8: #{tpu_custom_call.1} parent=1 // loop_exit
      _
    %288 = vsyncpa [#allocation3], 1
    %s289 = scalar_lea.sflag [#allocation3], 1
    %290 = vsyncpa %s289, 1

</llo_original>
